<compile_context>
chip_gen: v7x
topology: tpu7x:2x2x1
jax: 0.10.0
libtpu: 0.0.40
codegen_flags: <defaults>
</compile_context>

<pallas_src>
from functools import partial

import jax
import jax.numpy as jnp
from jax.experimental import pallas as pl
from jax.experimental.pallas import tpu as pltpu

# yolact constants (BGR order, matching MEANS / STD in the original repo)
MEANS = (103.94, 116.78, 123.68)
STD = (57.38, 57.12, 58.40)


def _bilinear_matrix(out_size: int, in_size: int) -> jnp.ndarray:
    """(out_size, in_size) matrix M s.t. M @ v == 1-D bilinear resize of v with
    PyTorch F.interpolate(mode='bilinear', align_corners=False) semantics."""
    i = jnp.arange(out_size, dtype=jnp.float32)
    src = (i + 0.5) * (in_size / out_size) - 0.5
    src = jnp.maximum(src, 0.0)                      # PyTorch clamps negative src to 0
    i0 = jnp.floor(src).astype(jnp.int32)
    i0 = jnp.minimum(i0, in_size - 1)
    i1 = jnp.minimum(i0 + 1, in_size - 1)
    frac = src - i0.astype(jnp.float32)
    m = jnp.zeros((out_size, in_size), jnp.float32)
    rows = jnp.arange(out_size)
    m = m.at[rows, i0].add(1.0 - frac)
    m = m.at[rows, i1].add(frac)
    return m


def _vmem_capacity_bytes() -> int:
    """Physical VMEM per TensorCore (128 MiB v5e/v6e, 64 MiB v7x); conservative
    fallback if the query is unavailable."""
    try:
        cap = int(getattr(pltpu.get_tpu_info(), "vmem_capacity_bytes", 0))
        if cap > 0:
            return cap
    except Exception:
        pass
    return 64 << 20


def _pick_out_split(dim: int, align: int, enable: bool) -> int:
    """Number of output tiles: largest p in {4,3,2} splitting `dim` into
    align-multiple tiles of >= 128 elements; 1 when disabled or no clean split."""
    if not enable:
        return 1
    for p in (4, 3, 2):
        t = dim // p
        if dim % p == 0 and t % align == 0 and t >= 128:
            return p
    return 1


def _fbt_kernel(x_ref, ah_ref, awt_ref, o_ref, *acc_refs,
                w_first, fuse, multi_strip, scale, bias):
    """grid = (batch n, output tile j, reduction strip k). All 3 channels per step.

    w_first=True  (contract W first):
        x_ref (1,3,H,strip)  ah_ref (Ho,H) [invariant]  awt_ref (strip,tWo)
        acc  = X_flat @ A_w^T strips, finalize out = A_h @ acc per channel.
    w_first=False (contract H first):
        x_ref (1,3,strip,W)  ah_ref (tHo,strip)  awt_ref (W,Wo) [invariant]
        acc  = A_h @ X strips, finalize out = acc_flat @ A_w^T (single dot).
    Normalization fused as out * scale[c] + bias[c] (compile-time constants,
    already in RGB output order)."""
    cdt = ah_ref.dtype
    k = pl.program_id(2)

    # ---- partial contraction over the current strip (all 3 channels) -------
    x = x_ref[0].astype(cdt)                              # (3,H,strip) | (3,strip,W)
    if w_first:
        awt = awt_ref[...]                                # (strip, tWo)
        if fuse:
            lhs = x.reshape(3 * x.shape[1], x.shape[2])   # (3H, strip), free flatten
            part = jnp.dot(lhs, awt, preferred_element_type=jnp.float32)   # (3H, tWo)
        else:
            part = jnp.stack([jnp.dot(x[c], awt, preferred_element_type=jnp.float32)
                              for c in range(3)])         # (3, H, tWo)
    else:
        ah = ah_ref[...]                                  # (tHo, strip)
        part = jnp.stack([jnp.dot(ah, x[c], preferred_element_type=jnp.float32)
                          for c in range(3)])             # (3, tHo, W)

    def _finalize(t):
        # t: f32 partial; second contraction + fused (x*scale + bias) normalization.
        if w_first:
            ah_full = ah_ref[...]                         # (Ho, H)
            hh = ah_full.shape[1]
            for c in range(3):
                tc = (t[c * hh:(c + 1) * hh] if fuse else t[c]).astype(cdt)
                r = jnp.dot(ah_full, tc, preferred_element_type=jnp.float32)  # (Ho,tWo)
                o_ref[0, c] = (r * scale[c] + bias[c]).astype(o_ref.dtype)
        else:
            awt_full = awt_ref[...]                       # (W, Wo)
            if fuse:
                t_ho = t.shape[1]
                flat = t.reshape(3 * t_ho, t.shape[2]).astype(cdt)            # (3tHo, W)
                r = jnp.dot(flat, awt_full, preferred_element_type=jnp.float32)
                for c in range(3):
                    o_ref[0, c] = (r[c * t_ho:(c + 1) * t_ho] * scale[c]
                                   + bias[c]).astype(o_ref.dtype)
            else:
                for c in range(3):
                    r = jnp.dot(t[c].astype(cdt), awt_full,
                                preferred_element_type=jnp.float32)
                    o_ref[0, c] = (r * scale[c] + bias[c]).astype(o_ref.dtype)

    if multi_strip:
        acc_ref = acc_refs[0]

        @pl.when(k == 0)
        def _():
            acc_ref[...] = part                           # no zero-init pass

        @pl.when(k > 0)
        def _():
            acc_ref[...] += part

        @pl.when(k == pl.num_programs(2) - 1)
        def _():
            _finalize(acc_ref[...])
    else:
        _finalize(part)                                   # single strip: no scratch


def fast_base_transform(img_nhwc: jnp.ndarray, max_size: int = 550, *,
                        compute_dtype=jnp.float32, max_strip: int | None = None,
                        vmem_fraction: float = 0.85) -> jnp.ndarray:
    """img_nhwc: (N, H, W, 3) image batch (BGR channel order, any numeric dtype).
    Returns (N, 3, max_size, max_size) float32 (RGB, normalized)."""
    N, H, W, C = img_nhwc.shape
    assert C == 3, "expected (N, H, W, 3) BGR input"
    Ho = Wo = int(max_size)

    # NHWC -> NCHW with the final BGR->RGB swap folded into the transpose. The
    # image keeps its source dtype (uint8 stays narrow through HBM); the cast to
    # the compute dtype happens inside the kernel.
    # TODO(synk): if the producer can hand over NCHW/RGB directly, drop this copy.
    x = jnp.transpose(img_nhwc, (0, 3, 1, 2))[:, ::-1]                 # (N, 3, H, W)

    # Normalization folded into one FMA, constants in output (RGB) channel order.
    scale = tuple(1.0 / s for s in STD[::-1])
    bias = tuple(-m / s for m, s in zip(MEANS[::-1], STD[::-1]))

    # ---- generation-aware VMEM budget --------------------------------------
    vmem_cap = _vmem_capacity_bytes()
    budget = int(vmem_cap * vmem_fraction)

    a_item = jnp.dtype(compute_dtype).itemsize
    x_item = jnp.dtype(x.dtype).itemsize
    sub = (8 * 4) // max(a_item, 1)          # sublane granule: 8 (f32) / 16 (bf16)

    # Static matmul-order choice: contract the larger input dimension first.
    w_first = W * (H + Wo) > H * (W + Ho)

    # Optional parallel output-tile axis: feeds v7x's second TensorCore when
    # N == 1 and bounds the accumulator / resize-matrix blocks.
    if w_first:
        n_out = _pick_out_split(Wo, 128, enable=(N == 1))
        tWo, tHo = Wo // n_out, Ho
    else:
        n_out = _pick_out_split(Ho, 8, enable=(N == 1))
        tWo, tHo = Wo, Ho // n_out

    # ---- budget-driven, lane-aligned strip of the contracted dimension -----
    if w_first:
        cdim = W
        per_strip = 2 * (3 * H * x_item + tWo * a_item)                # dbl-buffered
        fixed = 2 * Ho * H * a_item + 2 * 3 * Ho * tWo * 4 + 3 * H * tWo * 4
    else:
        cdim = H
        per_strip = 2 * (3 * W * x_item + tHo * a_item)
        fixed = 2 * W * Wo * a_item + 2 * 3 * tHo * Wo * 4 + 3 * tHo * W * 4

    headroom = 4 << 20
    strip_cap = (budget - fixed - headroom) // per_strip
    if max_strip is not None:
        strip_cap = min(strip_cap, int(max_strip))
    strip_cap = max(128, (int(strip_cap) // 128) * 128)

    if cdim <= strip_cap:
        strip, n_strips, cpad = cdim, 1, cdim
    else:
        n_strips = -(-cdim // strip_cap)                               # cdiv
        strip = ((-(-cdim // n_strips)) + 127) // 128 * 128
        cpad = strip * n_strips

    # ---- resize matrices (zero-padding of the contracted dim is exact) -----
    ah = _bilinear_matrix(Ho, H)                                       # (Ho, H)
    awt = _bilinear_matrix(Wo, W).T                                    # (W, Wo)
    if cpad > cdim:
        if w_first:
            awt = jnp.pad(awt, ((0, cpad - W), (0, 0)))
            x = jnp.pad(x, ((0, 0), (0, 0), (0, 0), (0, cpad - W)))
        else:
            ah = jnp.pad(ah, ((0, 0), (0, cpad - H)))
            x = jnp.pad(x, ((0, 0), (0, 0), (0, cpad - H), (0, 0)))
    ah = ah.astype(compute_dtype)
    awt = awt.astype(compute_dtype)

    multi_strip = n_strips > 1
    if w_first:
        fuse = (H % sub == 0)                  # free (3,H,strip)->(3H,strip) flatten
        x_spec = pl.BlockSpec((1, 3, H, strip), lambda n, j, k: (n, 0, 0, k))
        ah_spec = pl.BlockSpec((Ho, H), lambda n, j, k: (0, 0))        # grid-invariant
        awt_spec = pl.BlockSpec((strip, tWo), lambda n, j, k: (k, j))
        out_spec = pl.BlockSpec((1, 3, Ho, tWo), lambda n, j, k: (n, 0, 0, j))
        acc_shape = (3 * H, tWo) if fuse else (3, H, tWo)
    else:
        fuse = (tHo % sub == 0)                # free (3,tHo,W)->(3tHo,W) flatten
        x_spec = pl.BlockSpec((1, 3, strip, W), lambda n, j, k: (n, 0, k, 0))
        ah_spec = pl.BlockSpec((tHo, strip), lambda n, j, k: (j, k))
        awt_spec = pl.BlockSpec((W, Wo), lambda n, j, k: (0, 0))       # grid-invariant
        out_spec = pl.BlockSpec((1, 3, tHo, Wo), lambda n, j, k: (n, j, 0, 0))
        acc_shape = (3, tHo, W)

    scratch = [pltpu.VMEM(acc_shape, jnp.float32)] if multi_strip else []

    kernel = partial(_fbt_kernel, w_first=w_first, fuse=fuse,
                     multi_strip=multi_strip, scale=scale, bias=bias)

    out = pl.pallas_call(
        kernel,
        out_shape=jax.ShapeDtypeStruct((N, 3, Ho, Wo), jnp.float32),
        grid_spec=pltpu.PrefetchScalarGridSpec(
            num_scalar_prefetch=0,
            grid=(N, n_out, n_strips),            # reduction (strip) axis last
            in_specs=[x_spec, ah_spec, awt_spec],
            out_specs=out_spec,
            scratch_shapes=scratch),
        compiler_params=pltpu.CompilerParams(
            dimension_semantics=("parallel", "parallel", "arbitrary"),
            vmem_limit_bytes=int(budget)),
    )(x, ah, awt)
    return out


def _reference(img_nhwc: jnp.ndarray, max_size: int) -> jnp.ndarray:
    """Plain-JAX mirror of the PyTorch forward (same bilinear matrices)."""
    N, H, W, _ = img_nhwc.shape
    x = jnp.transpose(img_nhwc.astype(jnp.float32), (0, 3, 1, 2))
    ah = _bilinear_matrix(max_size, H)
    aw = _bilinear_matrix(max_size, W)
    r = jnp.einsum('oh,nchw->ncow', ah, x, precision=jax.lax.Precision.HIGHEST)
    r = jnp.einsum('ncow,qw->ncoq', r, aw, precision=jax.lax.Precision.HIGHEST)
    mean = jnp.asarray(MEANS, jnp.float32)[None, :, None, None]
    std = jnp.asarray(STD, jnp.float32)[None, :, None, None]
    return ((r - mean) / std)[:, ::-1]                    # BGR -> RGB


if __name__ == "__main__":
    max_size = 32
    key = jax.random.PRNGKey(0)
    # (shape, max_strip): exercise both contraction orders, the single-strip
    # fast path, and the padded multi-strip accumulator path.
    cases = [
        ((2, 16, 16, 3), None),      # square           -> contract H first, 1 strip
        ((2, 16, 24, 3), None),      # wide             -> contract W first, 1 strip
        ((1, 16, 300, 3), 128),      # padded, 3 strips -> W-first accumulator path
        ((1, 300, 16, 3), 128),      # padded, 3 strips -> H-first accumulator path
    ]
    keys = jax.random.split(key, len(cases))
    for (shape, mstrip), kk in zip(cases, keys):
        img = jax.random.uniform(kk, shape, jnp.float32, minval=0.0, maxval=255.0)
        fbt = jax.jit(partial(fast_base_transform, max_size=max_size,
                              max_strip=mstrip))
        out = jax.block_until_ready(fbt(img))
        assert out.shape == (shape[0], 3, max_size, max_size)
        assert out.dtype == jnp.float32
        ref = _reference(img, max_size)
        err = float(jnp.max(jnp.abs(out - ref)))
        assert err < 1e-2, f"{shape}: max abs err {err}"

    # bf16 MXU path (f32 accumulation): looser tolerance since pixels and
    # bilinear weights are quantized to bf16 before hitting the MXU.
    img = jax.random.uniform(keys[0], (2, 16, 16, 3), jnp.float32,
                             minval=0.0, maxval=255.0)
    fbt_bf16 = jax.jit(partial(fast_base_transform, max_size=max_size,
                               compute_dtype=jnp.bfloat16))
    out_bf16 = jax.block_until_ready(fbt_bf16(img))
    err_bf16 = float(jnp.max(jnp.abs(out_bf16 - _reference(img, max_size))))
    assert err_bf16 < 1e-1, f"bf16 path: max abs err {err_bf16}"

    print("KERNEL_OK")
</pallas_src>

<mosaic_0001>
module attributes {stable_mosaic.version = 11 : i64} {
  func.func private @main(%arg0: i32) attributes {dimension_semantics = [#tpu.dimension_semantics<core_parallel>], iteration_bounds = array<i64: 2>, tpu.core_type = #tpu.core_type<sc_scalar_subcore>, window_params = []} {
    return
  }
}

module attributes {stable_mosaic.version = 11 : i64} {
  func.func private @main(%arg0: i32) attributes {dimension_semantics = [#tpu.dimension_semantics<core_parallel>], iteration_bounds = array<i64: 2>, tpu.core_type = #tpu.core_type<sc_scalar_subcore>, window_params = []} {
    return
  }
}

module attributes {stable_mosaic.version = 11 : i64} {
  func.func @_fbt_kernel(%arg0: i32, %arg1: i32, %arg2: i32, %arg3: memref<1x3x16x16xf32, #tpu.memory_space<vmem>>, %arg4: memref<32x16xf32, #tpu.memory_space<vmem>>, %arg5: memref<16x32xf32, #tpu.memory_space<vmem>>, %arg6: memref<1x3x32x32xf32, #tpu.memory_space<vmem>>) attributes {dimension_semantics = [#tpu.dimension_semantics<parallel>, #tpu.dimension_semantics<parallel>, #tpu.dimension_semantics<arbitrary>], iteration_bounds = array<i64: 2, 1, 1>, scalar_prefetch = 0 : i64, scratch_operands = 0 : i64, tpu.core_type = #tpu.core_type<tc>, window_params = [{transform_indices = @transform_0, window_bounds = array<i64: 1, 3, 16, 16>}, {transform_indices = @transform_1, window_bounds = array<i64: 32, 16>}, {pipeline_mode = #tpu.pipeline_mode<synchronous>, transform_indices = @transform_2, window_bounds = array<i64: 16, 32>}, {transform_indices = @transform_3, window_bounds = array<i64: 1, 3, 32, 32>}]} {
    %c0 = arith.constant 0 : index
    %c0_0 = arith.constant 0 : index
    %c0_1 = arith.constant 0 : index
    %c0_2 = arith.constant 0 : index
    %0 = vector.load %arg3[%c0, %c0_0, %c0_1, %c0_2] : memref<1x3x16x16xf32, #tpu.memory_space<vmem>>, vector<1x3x16x16xf32>
    %1 = vector.shape_cast %0 : vector<1x3x16x16xf32> to vector<3x16x16xf32>
    %c0_3 = arith.constant 0 : index
    %c0_4 = arith.constant 0 : index
    %2 = vector.load %arg4[%c0_3, %c0_4] : memref<32x16xf32, #tpu.memory_space<vmem>>, vector<32x16xf32>
    %3 = vector.extract_strided_slice %1 {offsets = [0, 0, 0], sizes = [1, 16, 16], strides = [1, 1, 1]} : vector<3x16x16xf32> to vector<1x16x16xf32>
    %4 = vector.shape_cast %3 : vector<1x16x16xf32> to vector<16x16xf32>
    %cst = arith.constant dense<0.000000e+00> : vector<32x16xf32>
    %5 = tpu.matmul %2, %4, %cst {dimension_numbers = #tpu.dot_dimension_numbers<[1], [0], [0], [1], [0, 0, 1, 1], [], []>} : vector<32x16xf32>, vector<16x16xf32>, vector<32x16xf32> -> vector<32x16xf32>
    %6 = vector.extract_strided_slice %1 {offsets = [1, 0, 0], sizes = [1, 16, 16], strides = [1, 1, 1]} : vector<3x16x16xf32> to vector<1x16x16xf32>
    %7 = vector.shape_cast %6 : vector<1x16x16xf32> to vector<16x16xf32>
    %cst_5 = arith.constant dense<0.000000e+00> : vector<32x16xf32>
    %8 = tpu.matmul %2, %7, %cst_5 {dimension_numbers = #tpu.dot_dimension_numbers<[1], [0], [0], [1], [0, 0, 1, 1], [], []>} : vector<32x16xf32>, vector<16x16xf32>, vector<32x16xf32> -> vector<32x16xf32>
    %9 = vector.extract_strided_slice %1 {offsets = [2, 0, 0], sizes = [1, 16, 16], strides = [1, 1, 1]} : vector<3x16x16xf32> to vector<1x16x16xf32>
    %10 = vector.shape_cast %9 : vector<1x16x16xf32> to vector<16x16xf32>
    %cst_6 = arith.constant dense<0.000000e+00> : vector<32x16xf32>
    %11 = tpu.matmul %2, %10, %cst_6 {dimension_numbers = #tpu.dot_dimension_numbers<[1], [0], [0], [1], [0, 0, 1, 1], [], []>} : vector<32x16xf32>, vector<16x16xf32>, vector<32x16xf32> -> vector<32x16xf32>
    %12 = vector.shape_cast %5 : vector<32x16xf32> to vector<1x32x16xf32>
    %13 = vector.shape_cast %8 : vector<32x16xf32> to vector<1x32x16xf32>
    %14 = vector.shape_cast %11 : vector<32x16xf32> to vector<1x32x16xf32>
    %15 = tpu.concatenate %12, %13, %14 in 0 : vector<1x32x16xf32>, vector<1x32x16xf32>, vector<1x32x16xf32> -> vector<3x32x16xf32>
    %c0_7 = arith.constant 0 : index
    %c0_8 = arith.constant 0 : index
    %16 = vector.load %arg5[%c0_7, %c0_8] : memref<16x32xf32, #tpu.memory_space<vmem>>, vector<16x32xf32>
    %17 = vector.shape_cast %15 : vector<3x32x16xf32> to vector<96x16xf32>
    %cst_9 = arith.constant dense<0.000000e+00> : vector<96x32xf32>
    %18 = tpu.matmul %17, %16, %cst_9 {dimension_numbers = #tpu.dot_dimension_numbers<[1], [0], [0], [1], [0, 0, 1, 1], [], []>} : vector<96x16xf32>, vector<16x32xf32>, vector<96x32xf32> -> vector<96x32xf32>
    %19 = vector.extract_strided_slice %18 {offsets = [0, 0], sizes = [32, 32], strides = [1, 1]} : vector<96x32xf32> to vector<32x32xf32>
    %cst_10 = arith.constant 0.0171232875 : f32
    %20 = vector.broadcast %cst_10 : f32 to vector<32x32xf32>
    %21 = arith.mulf %19, %20 : vector<32x32xf32>
    %cst_11 = arith.constant -2.1178081 : f32
    %22 = vector.broadcast %cst_11 : f32 to vector<32x32xf32>
    %23 = arith.addf %21, %22 : vector<32x32xf32>
    %c0_12 = arith.constant 0 : index
    %c0_13 = arith.constant 0 : index
    %c0_14 = arith.constant 0 : index
    %c0_15 = arith.constant 0 : index
    %24 = vector.load %arg6[%c0_12, %c0_13, %c0_14, %c0_15] : memref<1x3x32x32xf32, #tpu.memory_space<vmem>>, vector<1x1x32x32xf32>
    %25 = vector.shape_cast %24 : vector<1x1x32x32xf32> to vector<32x32xf32>
    %26 = vector.shape_cast %23 : vector<32x32xf32> to vector<1x1x32x32xf32>
    tpu.vector_store %arg6[%c0_12, %c0_13, %c0_14, %c0_15], %26 {strides = array<i32>} : memref<1x3x32x32xf32, #tpu.memory_space<vmem>>, vector<1x1x32x32xf32>,
    %27 = vector.extract_strided_slice %18 {offsets = [32, 0], sizes = [32, 32], strides = [1, 1]} : vector<96x32xf32> to vector<32x32xf32>
    %cst_16 = arith.constant 0.0175070036 : f32
    %28 = vector.broadcast %cst_16 : f32 to vector<32x32xf32>
    %29 = arith.mulf %27, %28 : vector<32x32xf32>
    %cst_17 = arith.constant -2.04446769 : f32
    %30 = vector.broadcast %cst_17 : f32 to vector<32x32xf32>
    %31 = arith.addf %29, %30 : vector<32x32xf32>
    %c0_18 = arith.constant 0 : index
    %c1 = arith.constant 1 : index
    %c0_19 = arith.constant 0 : index
    %c0_20 = arith.constant 0 : index
    %32 = vector.load %arg6[%c0_18, %c1, %c0_19, %c0_20] : memref<1x3x32x32xf32, #tpu.memory_space<vmem>>, vector<1x1x32x32xf32>
    %33 = vector.shape_cast %32 : vector<1x1x32x32xf32> to vector<32x32xf32>
    %34 = vector.shape_cast %31 : vector<32x32xf32> to vector<1x1x32x32xf32>
    tpu.vector_store %arg6[%c0_18, %c1, %c0_19, %c0_20], %34 {strides = array<i32>} : memref<1x3x32x32xf32, #tpu.memory_space<vmem>>, vector<1x1x32x32xf32>,
    %35 = vector.extract_strided_slice %18 {offsets = [64, 0], sizes = [32, 32], strides = [1, 1]} : vector<96x32xf32> to vector<32x32xf32>
    %cst_21 = arith.constant 0.0174276754 : f32
    %36 = vector.broadcast %cst_21 : f32 to vector<32x32xf32>
    %37 = arith.mulf %35, %36 : vector<32x32xf32>
    %cst_22 = arith.constant -1.8114326 : f32
    %38 = vector.broadcast %cst_22 : f32 to vector<32x32xf32>
    %39 = arith.addf %37, %38 : vector<32x32xf32>
    %c0_23 = arith.constant 0 : index
    %c2 = arith.constant 2 : index
    %c0_24 = arith.constant 0 : index
    %c0_25 = arith.constant 0 : index
    %40 = vector.load %arg6[%c0_23, %c2, %c0_24, %c0_25] : memref<1x3x32x32xf32, #tpu.memory_space<vmem>>, vector<1x1x32x32xf32>
    %41 = vector.shape_cast %40 : vector<1x1x32x32xf32> to vector<32x32xf32>
    %42 = vector.shape_cast %39 : vector<32x32xf32> to vector<1x1x32x32xf32>
    tpu.vector_store %arg6[%c0_23, %c2, %c0_24, %c0_25], %42 {strides = array<i32>} : memref<1x3x32x32xf32, #tpu.memory_space<vmem>>, vector<1x1x32x32xf32>,
    return
  }
  func.func @transform_0(%arg0: i32, %arg1: i32, %arg2: i32) -> (i32, i32, i32, i32) {
    %c0_i32 = arith.constant 0 : i32
    %c0_i32_0 = arith.constant 0 : i32
    %c0_i32_1 = arith.constant 0 : i32
    return %arg0, %c0_i32, %arg2, %c0_i32_0 : i32, i32, i32, i32
  }
  func.func @transform_1(%arg0: i32, %arg1: i32, %arg2: i32) -> (i32, i32) {
    %c0_i32 = arith.constant 0 : i32
    return %arg1, %arg2 : i32, i32
  }
  func.func @transform_2(%arg0: i32, %arg1: i32, %arg2: i32) -> (i32, i32) {
    %c0_i32 = arith.constant 0 : i32
    %c0_i32_0 = arith.constant 0 : i32
    %c0_i32_1 = arith.constant 0 : i32
    return %c0_i32, %c0_i32_0 : i32, i32
  }
  func.func @transform_3(%arg0: i32, %arg1: i32, %arg2: i32) -> (i32, i32, i32, i32) {
    %c0_i32 = arith.constant 0 : i32
    %c0_i32_0 = arith.constant 0 : i32
    %c0_i32_1 = arith.constant 0 : i32
    return %arg0, %arg1, %c0_i32, %c0_i32_0 : i32, i32, i32, i32
  }
}

</mosaic_0001>

<llo_original>
// kernel: fast_base_transform.1
$region0: #{fast_base_transform.1}
  #allocation0 [shape = 'u32[]', space=smem, size = 0x4, offset = 0x4, fixed_abs, tag = 'smem constant byte address 0x4 - core index']
  #allocation1 [shape = 'u32[144,128]{1,0:T(1,128)}', space=vmem, size = 0x12000, scoped, tag = 'internal scratch']
  %s0 = inlined_call_operand.vmem [shape: f32[2,3,16,16], index: 0, kind: input, shape index: {}]
  %s1 = inlined_call_operand.vmem [shape: f32[32,16], index: 1, kind: input, shape index: {}]
  %s2 = inlined_call_operand.vmem [shape: f32[16,32], index: 2, kind: input, shape index: {}]
  %s3 = inlined_call_operand.hbm [shape: f32[2,3,32,32], index: 3, kind: output, shape index: {}]
  %s4 = sld [smem:[#allocation0]]
  $region45: #{fast_base_transform.1} parent=0
    _
  %s6 = ssub.s32 1, %s4
  %s7 = scalar_select 0, %s6, %s4
  $region1: #{fast_base_transform.1} parent=0
    #allocation2 [shape = 'u8[98304]{0}', space=vmem, size = 0x18000, scoped, tag = 'output window, operand 0']
    #allocation3 [shape = 's32[2]{0}', space=sflag, size = 0x8, scoped, tag = 'scoped memory for fast_base_transform.1']
    %8 = vsyncpa [#allocation3], 0
    %s9 = scalar_lea.sflag [#allocation3], 1
    %10 = vsyncpa %s9, 0
    loop: start=0, step=1, limit=4
    $region2: #{fast_base_transform.1} parent=1 // loop_pre_header
      _
    $region3: #{fast_base_transform.1} parent=1 // loop_header
      %s12 = sphi 0, %s16
      %p13 = scmp.ge.s32.totalorder %s12, 4
      %s19 = sphi 0, %s38
      %s20 = sphi 0, %s34
      %s21 = sphi 0, %s30
      %s22 = sphi 0, %s19
      %s23 = sphi 0, %s20
      %s24 = sphi 0, %s21
      %s25 = sphi 0, %s22
      %s26 = sphi 0, %s23
      %s27 = sphi 0, %s24
      %s43 = sphi 0, %s45
      %s46 = sphi 0, %s43
      %s47 = sphi 0, %s46
      %s63 = sphi 0, %s47
      %s71 = sphi 0, %s73
      %s74 = sphi 0, %s71
      %s75 = sphi 0, %s74
      %s91 = sphi 0, %s75
      %s95 = sphi 0, %s95
      %s97 = sphi 0, %s95
      %s98 = sphi 0, %s97
      %s112 = sphi 0, %s98
      %s120 = sphi 0, %s122
      %s123 = sphi 0, %s120
      %s124 = sphi 0, %s123
      %s140 = sphi 0, %s124
    $region4: #{fast_base_transform.1} parent=1 // loop_header_branch
      %15 = sbr.rel (%p13) target = $region8
    $region5: #{fast_base_transform.1} parent=1 // loop_body
      %s17 = ssub.s32 %s12, 1
      %s18 = ssub.s32 %s12, 2
      %s28 = sadd.s32 1, %s21
      %p29 = scmp.ge.s32.totalorder %s28, 1
      %s30 = scalar_select %p29, 0, %s28
      %s31 = sadd.s32 1, %s20
      %s32 = scalar_select %p29, %s31, %s20
      %p33 = scmp.ge.s32.totalorder %s32, 1
      %s34 = scalar_select %p33, 0, %s32
      %s35 = sadd.s32 1, %s19
      %s36 = scalar_select %p33, %s35, %s19
      %p37 = scmp.ge.s32.totalorder %s36, 2
      %s38 = scalar_select %p37, 0, %s36
      %s39 = ssub.s32 %s19, %s38
      %s40 = ssub.s32 %s21, %s30
      %s41 = sor.u32 %s39, %s40
      %p42 = scmp.eq.s32.totalorder %s41, 0
      %s44 = sadd.s32 %s43, 1
      %s45 = scalar_select %p42, %s43, %s44
      %p48 = pneg %p42
      %p49 = scmp.eq.s32.totalorder %s12, 1
      %p50 = por %p48, %p49
      %p51 = scmp.ne.s32.totalorder %s43, %s46
      %p52 = scmp.eq.s32.totalorder %s12, 0
      %p53 = por %p51, %p52
      %p54 = scmp.ne.s32.totalorder %s43, %s46
      %p55 = scmp.eq.s32.totalorder %s17, 1
      %p56 = por %p54, %p55
      %p57 = scmp.ne.s32.totalorder %s46, %s47
      %p58 = scmp.eq.s32.totalorder %s17, 0
      %p59 = por %p57, %p58
      %p60 = scmp.ne.s32.totalorder %s46, %s47
      %p61 = scmp.eq.s32.totalorder %s18, 1
      %p62 = por %p60, %p61
      %p64 = scmp.ne.s32.totalorder %s47, %s63
      %p65 = scmp.eq.s32.totalorder %s18, 0
      %p66 = por %p64, %p65
      %s67 = ssub.s32 %s20, %s34
      %s68 = ssub.s32 %s21, %s30
      %s69 = sor.u32 %s67, %s68
      %p70 = scmp.eq.s32.totalorder %s69, 0
      %s72 = sadd.s32 %s71, 1
      %s73 = scalar_select %p70, %s71, %s72
      %p76 = pneg %p70
      %p77 = scmp.eq.s32.totalorder %s12, 1
      %p78 = por %p76, %p77
      %p79 = scmp.ne.s32.totalorder %s71, %s74
      %p80 = scmp.eq.s32.totalorder %s12, 0
      %p81 = por %p79, %p80
      %p82 = scmp.ne.s32.totalorder %s71, %s74
      %p83 = scmp.eq.s32.totalorder %s17, 1
      %p84 = por %p82, %p83
      %p85 = scmp.ne.s32.totalorder %s74, %s75
      %p86 = scmp.eq.s32.totalorder %s17, 0
      %p87 = por %p85, %p86
      %p88 = scmp.ne.s32.totalorder %s74, %s75
      %p89 = scmp.eq.s32.totalorder %s18, 1
      %p90 = por %p88, %p89
      %p92 = scmp.ne.s32.totalorder %s75, %s91
      %p93 = scmp.eq.s32.totalorder %s18, 0
      %p94 = por %p92, %p93
      %s96 = sadd.s32 %s95, 1
      %p99 = scmp.eq.s32.totalorder %s12, 1
      %p100 = scmp.ne.s32.totalorder %s95, %s97
      %p101 = scmp.eq.s32.totalorder %s12, 0
      %p102 = por %p100, %p101
      %p103 = scmp.ne.s32.totalorder %s95, %s97
      %p104 = scmp.eq.s32.totalorder %s17, 1
      %p105 = por %p103, %p104
      %p106 = scmp.ne.s32.totalorder %s97, %s98
      %p107 = scmp.eq.s32.totalorder %s17, 0
      %p108 = por %p106, %p107
      %p109 = scmp.ne.s32.totalorder %s97, %s98
      %p110 = scmp.eq.s32.totalorder %s18, 1
      %p111 = por %p109, %p110
      %p113 = scmp.ne.s32.totalorder %s98, %s112
      %p114 = scmp.eq.s32.totalorder %s18, 0
      %p115 = por %p113, %p114
      %s116 = ssub.s32 %s19, %s38
      %s117 = ssub.s32 %s20, %s34
      %s118 = sor.u32 %s116, %s117
      %p119 = scmp.eq.s32.totalorder %s118, 0
      %s121 = sadd.s32 %s120, 1
      %s122 = scalar_select %p119, %s120, %s121
      %p125 = pneg %p119
      %p126 = scmp.eq.s32.totalorder %s12, 1
      %p127 = por %p125, %p126
      %p128 = scmp.ne.s32.totalorder %s120, %s123
      %p129 = scmp.eq.s32.totalorder %s12, 0
      %p130 = por %p128, %p129
      %p131 = scmp.ne.s32.totalorder %s120, %s123
      %p132 = scmp.eq.s32.totalorder %s17, 1
      %p133 = por %p131, %p132
      %p134 = scmp.ne.s32.totalorder %s123, %s124
      %p135 = scmp.eq.s32.totalorder %s17, 0
      %p136 = por %p134, %p135
      %p137 = scmp.ne.s32.totalorder %s123, %s124
      %p138 = scmp.eq.s32.totalorder %s18, 1
      %p139 = por %p137, %p138
      %p141 = scmp.ne.s32.totalorder %s124, %s140
      %p142 = scmp.eq.s32.totalorder %s18, 0
      %p143 = por %p141, %p142
      %p144 = scmp.le.s32.totalorder 1, %s12
      %p145 = scmp.lt.s32.totalorder %s12, 3
      %p146 = pnand %p144, %p145
      %p147 = pneg %p146
      // Predicated region
      $region9: #{fast_base_transform.1} parent=5 // pred_check
        _
      $region10: #{fast_base_transform.1} parent=5 // pred_check_branch
        %149 = sbr.rel (%p146) target = $region12
      $region11: #{fast_base_transform.1} parent=5 // pred_region
        %s150 = ssub.s32 %s12, 1
        // Predicated region
        $region13: #{fast_base_transform.1} parent=11 // pred_check
          %p151 = pneg %p87
        $region14: #{fast_base_transform.1} parent=11 // pred_check_branch
          %153 = sbr.rel (%p151) target = $region16
        $region15: #{fast_base_transform.1} parent=11 // pred_region
          %s154 = smul.u32 4, %s23
          %p155 = scmp.lt.s32.totalorder %s154, 3
          %s156 = scalar_select %p155, %s154, 3
          %p157 = scmp.lt.s32.totalorder %s24, 0
          %s158 = scalar_select %p157, %s24, 0
          %s159 = sadd.s32 %s158, %s156
          %s160 = smul.addr %s159, 8
          %s161 = scalar_lea.vmem %s1, %s160
          %s162 = smul.u32 4, %s23
        $region16: #{fast_base_transform.1} parent=11 // pred_fallthru
          _
        // Predicated region
        $region17: #{fast_base_transform.1} parent=11 // pred_check
          %p163 = pneg %p108
        $region18: #{fast_base_transform.1} parent=11 // pred_check_branch
          %165 = sbr.rel (%p163) target = $region20
        $region19: #{fast_base_transform.1} parent=11 // pred_region
          _
        $region20: #{fast_base_transform.1} parent=11 // pred_fallthru
          _
      $region12: #{fast_base_transform.1} parent=5 // pred_fallthru
        _
      %p166 = scmp.lt.s32.totalorder %s12, 2
      // Predicated region
      $region21: #{fast_base_transform.1} parent=5 // pred_check
        %p167 = pneg %p166
      $region22: #{fast_base_transform.1} parent=5 // pred_check_branch
        %169 = sbr.rel (%p167) target = $region24
      $region23: #{fast_base_transform.1} parent=5 // pred_region
        // Predicated region
        $region25: #{fast_base_transform.1} parent=23 // pred_check
          %p170 = pneg %p53
        $region26: #{fast_base_transform.1} parent=23 // pred_check_branch
          %172 = sbr.rel (%p170) target = $region28
        $region27: #{fast_base_transform.1} parent=23 // pred_region
          %s173 = smul.u32 2, %s21
          %p174 = scmp.lt.s32.totalorder %s19, 1
          %s175 = scalar_select %p174, %s19, 1
          %p176 = scmp.lt.s32.totalorder %s173, 1
          %s177 = scalar_select %p176, %s173, 1
          %s178 = smul.addr %s175, 6
          %s179 = sadd.s32 %s177, %s178
          %s180 = smul.addr %s179, 8
          %s181 = scalar_lea.vmem %s0, %s180
          %s182 = smul.u32 2, %s21
        $region28: #{fast_base_transform.1} parent=23 // pred_fallthru
          _
      $region24: #{fast_base_transform.1} parent=5 // pred_fallthru
        _
      %p183 = scmp.le.s32.totalorder 1, %s12
      %p184 = scmp.lt.s32.totalorder %s12, 3
      %p185 = pnand %p183, %p184
      %p186 = pneg %p185
      // Predicated region
      $region29: #{fast_base_transform.1} parent=5 // pred_check
        _
      $region30: #{fast_base_transform.1} parent=5 // pred_check_branch
        %188 = sbr.rel (%p185) target = $region32
      $region31: #{fast_base_transform.1} parent=5 // pred_region
        %s189 = ssub.s32 %s12, 1
        %s190 = smul.u32 2, %s24
        %p191 = scmp.lt.s32.totalorder %s22, 1
        %s192 = scalar_select %p191, %s22, 1
        %p193 = scmp.lt.s32.totalorder %s190, 1
        %s194 = scalar_select %p193, %s190, 1
        %s195 = smul.addr %s192, 6
        %s196 = sadd.s32 %s194, %s195
        %s197 = smul.addr %s196, 8
        %s198 = scalar_lea.vmem %s0, %s197
        %p199 = pneg %p59
        %p200 = pneg %p56
        %s201 = smul.u32 4, %s23
        %p202 = scmp.lt.s32.totalorder %s201, 3
        %s203 = scalar_select %p202, %s201, 3
        %p204 = scmp.lt.s32.totalorder %s24, 0
        %s205 = scalar_select %p204, %s24, 0
        %s206 = sadd.s32 %s205, %s203
        %s207 = smul.addr %s206, 8
        %s208 = scalar_lea.vmem %s1, %s207
        %p209 = pneg %p87
        %p210 = pneg %p84
        %p211 = pneg %p108
        %p212 = pneg %p105
        %p213 = pneg %p136
        %p214 = pneg %p133
        %s215 = sand.u32 %s123, 1
        %s216 = scalar_lea.sflag [#allocation3], %s215
        %s217 = sand.u32 %s123, 1
        %s218 = smul.addr %s217, 96
        %s219 = scalar_lea.vmem [#allocation2], %s218
        %s220 = smul.u32 2, %s24
        %p221 = scmp.lt.s32.totalorder %s22, 1
        %s222 = scalar_select %p221, %s22, 1
        %p223 = scmp.lt.s32.totalorder %s220, 1
        %s224 = scalar_select %p223, %s220, 1
        %s225 = smul.addr %s222, 6
        %s226 = sadd.s32 %s224, %s225
        %s227 = smul.addr %s226, 8
        %s228 = scalar_lea.vmem %s0, %s227
        %s229 = smul.u32 2, %s24
        %s230 = smul.u32 4, %s23
        %p231 = scmp.lt.s32.totalorder %s230, 3
        %s232 = scalar_select %p231, %s230, 3
        %p233 = scmp.lt.s32.totalorder %s24, 0
        %s234 = scalar_select %p233, %s24, 0
        %s235 = sadd.s32 %s234, %s232
        %s236 = smul.addr %s235, 8
        %s237 = scalar_lea.vmem %s1, %s236
        %s238 = smul.u32 4, %s23
        %s239 = smul.u32 3, %s23
        %v240 = vld [vmem:[%s228] sm:$0xff]
        %v241 = vld [vmem:[%s228 + $0x8] sm:$0xff]
        %v242 = vld [vmem:[%s228 + $0x10] sm:$0xff]
        %v243 = vld [vmem:[%s228 + $0x18] sm:$0xff]
        %v244 = vld [vmem:[%s228 + $0x20] sm:$0xff]
        %v245 = vld [vmem:[%s228 + $0x28] sm:$0xff]
        %v246 = vld [vmem:[%s237] sm:$0xff]
        %v247 = vld [vmem:[%s237 + $0x8] sm:$0xff]
        %v248 = vld [vmem:[%s237 + $0x10] sm:$0xff]
        %v249 = vld [vmem:[%s237 + $0x18] sm:$0xff]
        %vm250 = vcmask 130048
        %v252 = vsel %vm250, %v246, 0
        %v255 = vsel %vm250, %v247, 0
        %v258 = vsel %vm250, %v248, 0
        %v261 = vsel %vm250, %v249, 0
        %263 = vmatprep.subr.mxu0 0.0
        %264 = vmatpush1.msra.mxu0 %v240
        %265 = vmatprep.subr.mxu0 0.0
        %266 = vmatpush1.msra.mxu0 %v241
        %267 = vmatprep.subr.mxu0 0.0
        %268 = vmatpush1.msra.mxu0 0.0
        %269 = vmatprep.subr.mxu0 0.0
        %270 = vmatpush1.msra.mxu0 0.0
        %271 = vmatprep.subr.mxu0 0.0
        %272 = vmatpush1.msra.mxu0 0.0
        %273 = vmatprep.subr.mxu0 0.0
        %274 = vmatpush1.msra.mxu0 0.0
        %275 = vmatprep.subr.mxu0 0.0
        %276 = vmatpush1.msra.mxu0 0.0
        %277 = vmatprep.subr.mxu0 0.0
        %278 = vmatpush1.msra.mxu0 0.0
        %279 = vmatprep.subr.mxu0 0.0
        %280 = vmatpush1.msra.mxu0 0.0
        %281 = vmatprep.subr.mxu0 0.0
        %282 = vmatpush1.msra.mxu0 0.0
        %283 = vmatprep.subr.mxu0 0.0
        %284 = vmatpush1.msra.mxu0 0.0
        %285 = vmatprep.subr.mxu0 0.0
        %286 = vmatpush1.msra.mxu0 0.0
        %287 = vmatprep.subr.mxu0 0.0
        %288 = vmatpush1.msra.mxu0 0.0
        %289 = vmatprep.subr.mxu0 0.0
        %290 = vmatpush1.msra.mxu0 0.0
        %291 = vmatprep.subr.mxu0 0.0
        %292 = vmatpush1.msra.mxu0 0.0
        %293 = vmatprep.subr.mxu0 0.0
        %294 = vmatpush1.msra.mxu0 0.0
        %295 = vmatprep.subr.mxu0 0.0
        %296 = vmatpush1.msra.mxu0 0.0
        %297 = vmatprep.subr.mxu0 0.0
        %298 = vmatpush1.msra.mxu0 0.0
        %299 = vmatprep.subr.mxu0 0.0
        %300 = vmatpush1.msra.mxu0 0.0
        %301 = vmatprep.subr.mxu0 0.0
        %302 = vmatpush1.msra.mxu0 0.0
        %303 = vmatprep.subr.mxu0 0.0
        %304 = vmatpush1.msra.mxu0 0.0
        %305 = vmatprep.subr.mxu0 0.0
        %306 = vmatpush1.msra.mxu0 0.0
        %307 = vmatprep.subr.mxu0 0.0
        %308 = vmatpush1.msra.mxu0 0.0
        %309 = vmatprep.subr.mxu0 0.0
        %310 = vmatpush1.msra.mxu0 0.0
        %311 = vmatprep.subr.mxu0 0.0
        %312 = vmatpush1.msra.mxu0 0.0
        %313 = vmatprep.subr.mxu0 0.0
        %314 = vmatpush1.msra.mxu0 0.0
        %315 = vmatprep.subr.mxu0 0.0
        %316 = vmatpush1.msra.mxu0 0.0
        %317 = vmatprep.subr.mxu0 0.0
        %318 = vmatpush1.msra.mxu0 0.0
        %319 = vmatprep.subr.mxu0 0.0
        %320 = vmatpush1.msra.mxu0 0.0
        %321 = vmatprep.subr.mxu0 0.0
        %322 = vmatpush1.msra.mxu0 0.0
        %323 = vmatprep.subr.mxu0 0.0
        %324 = vmatpush1.msra.mxu0 0.0
        %325 = vmatprep.subr.mxu0 0.0
        %326 = vmatpush1.msra.mxu0 0.0
        %327 = vmatprep.mubr.f32.mxu0 0.0
        %328 = vmatmul.mubr.f32.gmra.mrb[0].mxu0 %v252
        %v329 = vpop.f32.mrb[0].mxu0
        %v330 = vadd.f32 0.0, %v329
        %v331 = vpop.f32.mrb[0].mxu0
        %332 = vmatprep.mubr.f32.mxu0 0.0
        %333 = vmatmul.mubr.f32.gmra.mrb[0].mxu0 %v255
        %v334 = vpop.f32.mrb[0].mxu0
        %v335 = vadd.f32 0.0, %v334
        %v336 = vpop.f32.mrb[0].mxu0
        %337 = vmatprep.mubr.f32.mxu0 0.0
        %338 = vmatmul.mubr.f32.gmra.mrb[0].mxu0 %v258
        %v339 = vpop.f32.mrb[0].mxu0
        %v340 = vadd.f32 0.0, %v339
        %v341 = vpop.f32.mrb[0].mxu0
        %342 = vmatprep.mubr.f32.mxu0 0.0
        %343 = vmatmul.mubr.f32.gmra.mrb[0].mxu0 %v261
        %v344 = vpop.f32.mrb[0].mxu0
        %v345 = vadd.f32 0.0, %v344
        %v346 = vpop.f32.mrb[0].mxu0
        %347 = vdwg.mxu0
        %348 = vmatprep.subr.mxu0 0.0
        %349 = vmatpush1.msra.mxu0 %v242
        %350 = vmatprep.subr.mxu0 0.0
        %351 = vmatpush1.msra.mxu0 %v243
        %352 = vmatprep.subr.mxu0 0.0
        %353 = vmatpush1.msra.mxu0 0.0
        %354 = vmatprep.subr.mxu0 0.0
        %355 = vmatpush1.msra.mxu0 0.0
        %356 = vmatprep.subr.mxu0 0.0
        %357 = vmatpush1.msra.mxu0 0.0
        %358 = vmatprep.subr.mxu0 0.0
        %359 = vmatpush1.msra.mxu0 0.0
        %360 = vmatprep.subr.mxu0 0.0
        %361 = vmatpush1.msra.mxu0 0.0
        %362 = vmatprep.subr.mxu0 0.0
        %363 = vmatpush1.msra.mxu0 0.0
        %364 = vmatprep.subr.mxu0 0.0
        %365 = vmatpush1.msra.mxu0 0.0
        %366 = vmatprep.subr.mxu0 0.0
        %367 = vmatpush1.msra.mxu0 0.0
        %368 = vmatprep.subr.mxu0 0.0
        %369 = vmatpush1.msra.mxu0 0.0
        %370 = vmatprep.subr.mxu0 0.0
        %371 = vmatpush1.msra.mxu0 0.0
        %372 = vmatprep.subr.mxu0 0.0
        %373 = vmatpush1.msra.mxu0 0.0
        %374 = vmatprep.subr.mxu0 0.0
        %375 = vmatpush1.msra.mxu0 0.0
        %376 = vmatprep.subr.mxu0 0.0
        %377 = vmatpush1.msra.mxu0 0.0
        %378 = vmatprep.subr.mxu0 0.0
        %379 = vmatpush1.msra.mxu0 0.0
        %380 = vmatprep.subr.mxu0 0.0
        %381 = vmatpush1.msra.mxu0 0.0
        %382 = vmatprep.subr.mxu0 0.0
        %383 = vmatpush1.msra.mxu0 0.0
        %384 = vmatprep.subr.mxu0 0.0
        %385 = vmatpush1.msra.mxu0 0.0
        %386 = vmatprep.subr.mxu0 0.0
        %387 = vmatpush1.msra.mxu0 0.0
        %388 = vmatprep.subr.mxu0 0.0
        %389 = vmatpush1.msra.mxu0 0.0
        %390 = vmatprep.subr.mxu0 0.0
        %391 = vmatpush1.msra.mxu0 0.0
        %392 = vmatprep.subr.mxu0 0.0
        %393 = vmatpush1.msra.mxu0 0.0
        %394 = vmatprep.subr.mxu0 0.0
        %395 = vmatpush1.msra.mxu0 0.0
        %396 = vmatprep.subr.mxu0 0.0
        %397 = vmatpush1.msra.mxu0 0.0
        %398 = vmatprep.subr.mxu0 0.0
        %399 = vmatpush1.msra.mxu0 0.0
        %400 = vmatprep.subr.mxu0 0.0
        %401 = vmatpush1.msra.mxu0 0.0
        %402 = vmatprep.subr.mxu0 0.0
        %403 = vmatpush1.msra.mxu0 0.0
        %404 = vmatprep.subr.mxu0 0.0
        %405 = vmatpush1.msra.mxu0 0.0
        %406 = vmatprep.subr.mxu0 0.0
        %407 = vmatpush1.msra.mxu0 0.0
        %408 = vmatprep.subr.mxu0 0.0
        %409 = vmatpush1.msra.mxu0 0.0
        %410 = vmatprep.subr.mxu0 0.0
        %411 = vmatpush1.msra.mxu0 0.0
        %412 = vmatprep.mubr.f32.mxu0 0.0
        %413 = vmatmul.mubr.f32.gmra.mrb[0].mxu0 %v252
        %v414 = vpop.f32.mrb[0].mxu0
        %v415 = vadd.f32 0.0, %v414
        %v416 = vpop.f32.mrb[0].mxu0
        %417 = vmatprep.mubr.f32.mxu0 0.0
        %418 = vmatmul.mubr.f32.gmra.mrb[0].mxu0 %v255
        %v419 = vpop.f32.mrb[0].mxu0
        %v420 = vadd.f32 0.0, %v419
        %v421 = vpop.f32.mrb[0].mxu0
        %422 = vmatprep.mubr.f32.mxu0 0.0
        %423 = vmatmul.mubr.f32.gmra.mrb[0].mxu0 %v258
        %v424 = vpop.f32.mrb[0].mxu0
        %v425 = vadd.f32 0.0, %v424
        %v426 = vpop.f32.mrb[0].mxu0
        %427 = vmatprep.mubr.f32.mxu0 0.0
        %428 = vmatmul.mubr.f32.gmra.mrb[0].mxu0 %v261
        %v429 = vpop.f32.mrb[0].mxu0
        %v430 = vadd.f32 0.0, %v429
        %v431 = vpop.f32.mrb[0].mxu0
        %432 = vdwg.mxu0
        %433 = vmatprep.subr.mxu0 0.0
        %434 = vmatpush1.msra.mxu0 %v244
        %435 = vmatprep.subr.mxu0 0.0
        %436 = vmatpush1.msra.mxu0 %v245
        %437 = vmatprep.subr.mxu0 0.0
        %438 = vmatpush1.msra.mxu0 0.0
        %439 = vmatprep.subr.mxu0 0.0
        %440 = vmatpush1.msra.mxu0 0.0
        %441 = vmatprep.subr.mxu0 0.0
        %442 = vmatpush1.msra.mxu0 0.0
        %443 = vmatprep.subr.mxu0 0.0
        %444 = vmatpush1.msra.mxu0 0.0
        %445 = vmatprep.subr.mxu0 0.0
        %446 = vmatpush1.msra.mxu0 0.0
        %447 = vmatprep.subr.mxu0 0.0
        %448 = vmatpush1.msra.mxu0 0.0
        %449 = vmatprep.subr.mxu0 0.0
        %450 = vmatpush1.msra.mxu0 0.0
        %451 = vmatprep.subr.mxu0 0.0
        %452 = vmatpush1.msra.mxu0 0.0
        %453 = vmatprep.subr.mxu0 0.0
        %454 = vmatpush1.msra.mxu0 0.0
        %455 = vmatprep.subr.mxu0 0.0
        %456 = vmatpush1.msra.mxu0 0.0
        %457 = vmatprep.subr.mxu0 0.0
        %458 = vmatpush1.msra.mxu0 0.0
        %459 = vmatprep.subr.mxu0 0.0
        %460 = vmatpush1.msra.mxu0 0.0
        %461 = vmatprep.subr.mxu0 0.0
        %462 = vmatpush1.msra.mxu0 0.0
        %463 = vmatprep.subr.mxu0 0.0
        %464 = vmatpush1.msra.mxu0 0.0
        %465 = vmatprep.subr.mxu0 0.0
        %466 = vmatpush1.msra.mxu0 0.0
        %467 = vmatprep.subr.mxu0 0.0
        %468 = vmatpush1.msra.mxu0 0.0
        %469 = vmatprep.subr.mxu0 0.0
        %470 = vmatpush1.msra.mxu0 0.0
        %471 = vmatprep.subr.mxu0 0.0
        %472 = vmatpush1.msra.mxu0 0.0
        %473 = vmatprep.subr.mxu0 0.0
        %474 = vmatpush1.msra.mxu0 0.0
        %475 = vmatprep.subr.mxu0 0.0
        %476 = vmatpush1.msra.mxu0 0.0
        %477 = vmatprep.subr.mxu0 0.0
        %478 = vmatpush1.msra.mxu0 0.0
        %479 = vmatprep.subr.mxu0 0.0
        %480 = vmatpush1.msra.mxu0 0.0
        %481 = vmatprep.subr.mxu0 0.0
        %482 = vmatpush1.msra.mxu0 0.0
        %483 = vmatprep.subr.mxu0 0.0
        %484 = vmatpush1.msra.mxu0 0.0
        %485 = vmatprep.subr.mxu0 0.0
        %486 = vmatpush1.msra.mxu0 0.0
        %487 = vmatprep.subr.mxu0 0.0
        %488 = vmatpush1.msra.mxu0 0.0
        %489 = vmatprep.subr.mxu0 0.0
        %490 = vmatpush1.msra.mxu0 0.0
        %491 = vmatprep.subr.mxu0 0.0
        %492 = vmatpush1.msra.mxu0 0.0
        %493 = vmatprep.subr.mxu0 0.0
        %494 = vmatpush1.msra.mxu0 0.0
        %495 = vmatprep.subr.mxu0 0.0
        %496 = vmatpush1.msra.mxu0 0.0
        %497 = vmatprep.mubr.f32.mxu0 0.0
        %498 = vmatmul.mubr.f32.gmra.mrb[0].mxu0 %v252
        %v499 = vpop.f32.mrb[0].mxu0
        %v500 = vadd.f32 0.0, %v499
        %v501 = vpop.f32.mrb[0].mxu0
        %502 = vmatprep.mubr.f32.mxu0 0.0
        %503 = vmatmul.mubr.f32.gmra.mrb[0].mxu0 %v255
        %v504 = vpop.f32.mrb[0].mxu0
        %v505 = vadd.f32 0.0, %v504
        %v506 = vpop.f32.mrb[0].mxu0
        %507 = vmatprep.mubr.f32.mxu0 0.0
        %508 = vmatmul.mubr.f32.gmra.mrb[0].mxu0 %v258
        %v509 = vpop.f32.mrb[0].mxu0
        %v510 = vadd.f32 0.0, %v509
        %v511 = vpop.f32.mrb[0].mxu0
        %512 = vmatprep.mubr.f32.mxu0 0.0
        %513 = vmatmul.mubr.f32.gmra.mrb[0].mxu0 %v261
        %v514 = vpop.f32.mrb[0].mxu0
        %v515 = vadd.f32 0.0, %v514
        %v516 = vpop.f32.mrb[0].mxu0
        %517 = vdwg.mxu0
        %v518 = vld [vmem:[%s2] sm:$0xff]
        %v519 = vld [vmem:[%s2 + $0x8] sm:$0xff]
        %v521 = vsel %vm250, %v330, 0
        %v524 = vsel %vm250, %v335, 0
        %v527 = vsel %vm250, %v340, 0
        %v530 = vsel %vm250, %v345, 0
        %v533 = vsel %vm250, %v415, 0
        %v536 = vsel %vm250, %v420, 0
        %v539 = vsel %vm250, %v425, 0
        %v542 = vsel %vm250, %v430, 0
        %v545 = vsel %vm250, %v500, 0
        %v548 = vsel %vm250, %v505, 0
        %v551 = vsel %vm250, %v510, 0
        %v554 = vsel %vm250, %v515, 0
        %556 = vmatprep.subr.mxu0 0.0
        %557 = vmatpush1.msra.mxu0 %v518
        %558 = vmatprep.subr.mxu0 0.0
        %559 = vmatpush1.msra.mxu0 %v519
        %560 = vmatprep.subr.mxu0 0.0
        %561 = vmatpush1.msra.mxu0 0.0
        %562 = vmatprep.subr.mxu0 0.0
        %563 = vmatpush1.msra.mxu0 0.0
        %564 = vmatprep.subr.mxu0 0.0
        %565 = vmatpush1.msra.mxu0 0.0
        %566 = vmatprep.subr.mxu0 0.0
        %567 = vmatpush1.msra.mxu0 0.0
        %568 = vmatprep.subr.mxu0 0.0
        %569 = vmatpush1.msra.mxu0 0.0
        %570 = vmatprep.subr.mxu0 0.0
        %571 = vmatpush1.msra.mxu0 0.0
        %572 = vmatprep.subr.mxu0 0.0
        %573 = vmatpush1.msra.mxu0 0.0
        %574 = vmatprep.subr.mxu0 0.0
        %575 = vmatpush1.msra.mxu0 0.0
        %576 = vmatprep.subr.mxu0 0.0
        %577 = vmatpush1.msra.mxu0 0.0
        %578 = vmatprep.subr.mxu0 0.0
        %579 = vmatpush1.msra.mxu0 0.0
        %580 = vmatprep.subr.mxu0 0.0
        %581 = vmatpush1.msra.mxu0 0.0
        %582 = vmatprep.subr.mxu0 0.0
        %583 = vmatpush1.msra.mxu0 0.0
        %584 = vmatprep.subr.mxu0 0.0
        %585 = vmatpush1.msra.mxu0 0.0
        %586 = vmatprep.subr.mxu0 0.0
        %587 = vmatpush1.msra.mxu0 0.0
        %588 = vmatprep.subr.mxu0 0.0
        %589 = vmatpush1.msra.mxu0 0.0
        %590 = vmatprep.subr.mxu0 0.0
        %591 = vmatpush1.msra.mxu0 0.0
        %592 = vmatprep.subr.mxu0 0.0
        %593 = vmatpush1.msra.mxu0 0.0
        %594 = vmatprep.subr.mxu0 0.0
        %595 = vmatpush1.msra.mxu0 0.0
        %596 = vmatprep.subr.mxu0 0.0
        %597 = vmatpush1.msra.mxu0 0.0
        %598 = vmatprep.subr.mxu0 0.0
        %599 = vmatpush1.msra.mxu0 0.0
        %600 = vmatprep.subr.mxu0 0.0
        %601 = vmatpush1.msra.mxu0 0.0
        %602 = vmatprep.subr.mxu0 0.0
        %603 = vmatpush1.msra.mxu0 0.0
        %604 = vmatprep.subr.mxu0 0.0
        %605 = vmatpush1.msra.mxu0 0.0
        %606 = vmatprep.subr.mxu0 0.0
        %607 = vmatpush1.msra.mxu0 0.0
        %608 = vmatprep.subr.mxu0 0.0
        %609 = vmatpush1.msra.mxu0 0.0
        %610 = vmatprep.subr.mxu0 0.0
        %611 = vmatpush1.msra.mxu0 0.0
        %612 = vmatprep.subr.mxu0 0.0
        %613 = vmatpush1.msra.mxu0 0.0
        %614 = vmatprep.subr.mxu0 0.0
        %615 = vmatpush1.msra.mxu0 0.0
        %616 = vmatprep.subr.mxu0 0.0
        %617 = vmatpush1.msra.mxu0 0.0
        %618 = vmatprep.subr.mxu0 0.0
        %619 = vmatpush1.msra.mxu0 0.0
        %620 = vmatprep.mubr.f32.mxu0 0.0
        %621 = vmatmul.mubr.f32.gmra.mrb[0].mxu0 %v521
        %v622 = vpop.f32.mrb[0].mxu0
        %v623 = vadd.f32 0.0, %v622
        %v624 = vpop.f32.mrb[0].mxu0
        %625 = vmatprep.mubr.f32.mxu0 0.0
        %626 = vmatmul.mubr.f32.gmra.mrb[0].mxu0 %v524
        %v627 = vpop.f32.mrb[0].mxu0
        %v628 = vadd.f32 0.0, %v627
        %v629 = vpop.f32.mrb[0].mxu0
        %630 = vmatprep.mubr.f32.mxu0 0.0
        %631 = vmatmul.mubr.f32.gmra.mrb[0].mxu0 %v527
        %v632 = vpop.f32.mrb[0].mxu0
        %v633 = vadd.f32 0.0, %v632
        %v634 = vpop.f32.mrb[0].mxu0
        %635 = vmatprep.mubr.f32.mxu0 0.0
        %636 = vmatmul.mubr.f32.gmra.mrb[0].mxu0 %v530
        %v637 = vpop.f32.mrb[0].mxu0
        %v638 = vadd.f32 0.0, %v637
        %v639 = vpop.f32.mrb[0].mxu0
        %640 = vmatprep.mubr.f32.mxu0 0.0
        %641 = vmatmul.mubr.f32.gmra.mrb[0].mxu0 %v533
        %v642 = vpop.f32.mrb[0].mxu0
        %v643 = vadd.f32 0.0, %v642
        %v644 = vpop.f32.mrb[0].mxu0
        %645 = vmatprep.mubr.f32.mxu0 0.0
        %646 = vmatmul.mubr.f32.gmra.mrb[0].mxu0 %v536
        %v647 = vpop.f32.mrb[0].mxu0
        %v648 = vadd.f32 0.0, %v647
        %v649 = vpop.f32.mrb[0].mxu0
        %650 = vmatprep.mubr.f32.mxu0 0.0
        %651 = vmatmul.mubr.f32.gmra.mrb[0].mxu0 %v539
        %v652 = vpop.f32.mrb[0].mxu0
        %v653 = vadd.f32 0.0, %v652
        %v654 = vpop.f32.mrb[0].mxu0
        %655 = vmatprep.mubr.f32.mxu0 0.0
        %656 = vmatmul.mubr.f32.gmra.mrb[0].mxu0 %v542
        %v657 = vpop.f32.mrb[0].mxu0
        %v658 = vadd.f32 0.0, %v657
        %v659 = vpop.f32.mrb[0].mxu0
        %660 = vmatprep.mubr.f32.mxu0 0.0
        %661 = vmatmul.mubr.f32.gmra.mrb[0].mxu0 %v545
        %v662 = vpop.f32.mrb[0].mxu0
        %v663 = vadd.f32 0.0, %v662
        %v664 = vpop.f32.mrb[0].mxu0
        %665 = vmatprep.mubr.f32.mxu0 0.0
        %666 = vmatmul.mubr.f32.gmra.mrb[0].mxu0 %v548
        %v667 = vpop.f32.mrb[0].mxu0
        %v668 = vadd.f32 0.0, %v667
        %v669 = vpop.f32.mrb[0].mxu0
        %670 = vmatprep.mubr.f32.mxu0 0.0
        %671 = vmatmul.mubr.f32.gmra.mrb[0].mxu0 %v551
        %v672 = vpop.f32.mrb[0].mxu0
        %v673 = vadd.f32 0.0, %v672
        %v674 = vpop.f32.mrb[0].mxu0
        %675 = vmatprep.mubr.f32.mxu0 0.0
        %676 = vmatmul.mubr.f32.gmra.mrb[0].mxu0 %v554
        %v677 = vpop.f32.mrb[0].mxu0
        %v678 = vadd.f32 0.0, %v677
        %v679 = vpop.f32.mrb[0].mxu0
        %680 = vdwg.mxu0
        %v681 = vmul.f32 %v623, 0.017123288
        %v682 = vmul.f32 %v628, 0.017123288
        %v683 = vmul.f32 %v633, 0.017123288
        %v684 = vmul.f32 %v638, 0.017123288
        %v685 = vadd.f32 %v681, -2.117808
        %v686 = vadd.f32 %v682, -2.117808
        %v687 = vadd.f32 %v683, -2.117808
        %v688 = vadd.f32 %v684, -2.117808
        %vm689 = vcmask 261120
        %690 = vst.msk [vmem:[%s219] sm:$0xff] %vm689, %v685
        %691 = vst.msk [vmem:[%s219 + $0x8] sm:$0xff] %vm689, %v686
        %692 = vst.msk [vmem:[%s219 + $0x10] sm:$0xff] %vm689, %v687
        %693 = vst.msk [vmem:[%s219 + $0x18] sm:$0xff] %vm689, %v688
        %v694 = vmul.f32 %v643, 0.017507004
        %v695 = vmul.f32 %v648, 0.017507004
        %v696 = vmul.f32 %v653, 0.017507004
        %v697 = vmul.f32 %v658, 0.017507004
        %v698 = vadd.f32 %v694, -2.0444677
        %v699 = vadd.f32 %v695, -2.0444677
        %v700 = vadd.f32 %v696, -2.0444677
        %v701 = vadd.f32 %v697, -2.0444677
        %s702 = scalar_lea.vmem %s219, 32 [#allocation2]
        %703 = vst.msk [vmem:[%s702] sm:$0xff] %vm689, %v698
        %704 = vst.msk [vmem:[%s702 + $0x8] sm:$0xff] %vm689, %v699
        %705 = vst.msk [vmem:[%s702 + $0x10] sm:$0xff] %vm689, %v700
        %706 = vst.msk [vmem:[%s702 + $0x18] sm:$0xff] %vm689, %v701
        %v707 = vmul.f32 %v663, 0.017427675
        %v708 = vmul.f32 %v668, 0.017427675
        %v709 = vmul.f32 %v673, 0.017427675
        %v710 = vmul.f32 %v678, 0.017427675
        %v711 = vadd.f32 %v707, -1.8114326
        %v712 = vadd.f32 %v708, -1.8114326
        %v713 = vadd.f32 %v709, -1.8114326
        %v714 = vadd.f32 %v710, -1.8114326
        %s715 = scalar_lea.vmem %s219, 64 [#allocation2]
        %716 = vst.msk [vmem:[%s715] sm:$0xff] %vm689, %v711
        %717 = vst.msk [vmem:[%s715 + $0x8] sm:$0xff] %vm689, %v712
        %718 = vst.msk [vmem:[%s715 + $0x10] sm:$0xff] %vm689, %v713
        %719 = vst.msk [vmem:[%s715 + $0x18] sm:$0xff] %vm689, %v714
        %s720 = sand.u32 %s123, 1
        %s721 = scalar_lea.sflag [#allocation3], %s720
        %s722 = sand.u32 %s123, 1
        %s723 = smul.addr %s722, 96
        %s724 = scalar_lea.vmem [#allocation2], %s723
        // Predicated region
        $region33: #{fast_base_transform.1} parent=31 // pred_check
          %p725 = pneg %p133
        $region34: #{fast_base_transform.1} parent=31 // pred_check_branch
          %727 = sbr.rel (%p725) target = $region36
        $region35: #{fast_base_transform.1} parent=31 // pred_region
          %s728 = smul.u32 3, %s23
          %s730 = ssub.s32 1536, 1536
          %731 = vsyncadd %s721, %s730
          %s732 = smul.addr %s728, 4
          %s733 = smul.addr %s22, 12
          %s734 = sadd.s32 %s732, %s733
          %s735 = smul.addr %s734, 128
          %s736 = scalar_lea.hbm %s3, %s735
          %s737 = sshll.u32 %s724, 4
          %s738 = int_to_ptr.vmem [resolvable:$true] %s737
          %743 = dma.vmem_to_hbm [thread:$0]  %s738, 1536, %s736, %s721, 128, 128, 8
        $region36: #{fast_base_transform.1} parent=31 // pred_fallthru
          _
      $region32: #{fast_base_transform.1} parent=5 // pred_fallthru
        _
      %p744 = scmp.le.s32.totalorder 2, %s12
      // Predicated region
      $region37: #{fast_base_transform.1} parent=5 // pred_check
        %p745 = pneg %p744
      $region38: #{fast_base_transform.1} parent=5 // pred_check_branch
        %747 = sbr.rel (%p745) target = $region40
      $region39: #{fast_base_transform.1} parent=5 // pred_region
        %s748 = ssub.s32 %s12, 2
        // Predicated region
        $region41: #{fast_base_transform.1} parent=39 // pred_check
          %p749 = pneg %p139
        $region42: #{fast_base_transform.1} parent=39 // pred_check_branch
          %751 = sbr.rel (%p749) target = $region44
        $region43: #{fast_base_transform.1} parent=39 // pred_region
          %s752 = sand.u32 %s124, 1
          %s753 = scalar_lea.sflag [#allocation3], %s752
          %s754 = sand.u32 %s124, 1
          %s755 = smul.addr %s754, 96
          %s756 = scalar_lea.vmem [#allocation2], %s755
          %757 = dma.done %s753, 1536
        $region44: #{fast_base_transform.1} parent=39 // pred_fallthru
          _
      $region40: #{fast_base_transform.1} parent=5 // pred_fallthru
        _
    $region6: #{fast_base_transform.1} parent=1 // loop_footer
      %s16 = sadd.s32 1, %s12
    $region7: #{fast_base_transform.1} parent=1 // loop_footer_branch
      %11 = sbr.rel target = $region3
    $region8: #{fast_base_transform.1} parent=1 // loop_exit
      _
    %758 = vsyncpa [#allocation3], 1
    %s759 = scalar_lea.sflag [#allocation3], 1
    %760 = vsyncpa %s759, 1

</llo_original>
